<compile_context>
chip_gen: v6e
topology: v6e:2x2x1
jax: 0.10.0
libtpu: 0.0.40
codegen_flags: <defaults>
</compile_context>

<pallas_src>
import jax
import jax.numpy as jnp
from jax import lax
from jax.experimental import pallas as pl
from jax.experimental.pallas import tpu as pltpu

EPS = 1e-5
LANE = 128
K_TILE = 512            # Fin chunk size when Fin is large
K_RESIDENT_MAX = 2048   # keep the whole Fin in one block up to this size


def _round_up(x, m):
    return (x + m - 1) // m * m


def _vmem_budget_bytes():
    """Usable scoped-VMEM budget with per-generation headroom."""
    try:
        cap = pltpu.get_tpu_info().vmem_capacity_bytes
    except Exception:
        cap = 64 * 1024 * 1024  # conservative (v7x-sized) fallback
    # ~3/4 of physical, capped at 96 MiB: v5e/v6e (128 MiB) -> 96 MiB,
    # v7x (64 MiB) -> 48 MiB.  Never exceeds physical VMEM.
    return int(min(cap * 3 // 4, 96 * 1024 * 1024))


def _fc_bn_relu_kernel(x_ref, w_ref, gamma_ref, beta_ref, o_ref, acc_ref):
    """Grid = (Fout tiles [parallel], Fin tiles [arbitrary, reduction])."""
    k = pl.program_id(1)

    @pl.when(k == 0)
    def _():
        acc_ref[...] = jnp.zeros_like(acc_ref)

    # MXU: contract the LAST dim of x (N, tk) bf16 and w (tile_f, tk) bf16
    # into an f32 accumulator; no weight transpose (no XLU traffic).
    acc_ref[...] += lax.dot_general(
        x_ref[...], w_ref[...],
        dimension_numbers=(((1,), (1,)), ((), ())),
        preferred_element_type=jnp.float32,
    )

    @pl.when(k == pl.num_programs(1) - 1)
    def _():
        fc = acc_ref[...]                                   # (N, tile_f) f32
        inv_n = jnp.float32(1.0 / fc.shape[0])
        # Fused one-pass batch statistics (training mode, biased variance).
        mean = jnp.sum(fc, axis=0, keepdims=True) * inv_n
        e_x2 = jnp.sum(fc * fc, axis=0, keepdims=True) * inv_n
        var = jnp.maximum(e_x2 - mean * mean, 0.0)
        inv_std = lax.rsqrt(var + EPS)                      # EUP
        scale = inv_std * gamma_ref[...]
        shift = beta_ref[...] - mean * scale
        # Single elementwise sweep: normalize + affine + ReLU, lane-dense store.
        o_ref[...] = jnp.maximum(fc * scale + shift, 0.0).astype(o_ref.dtype)


def fully_connected_forward(x, w, gamma, beta, *, tile_f=None):
    """x: (N, Fin), w: (Fout, Fin), gamma/beta: (Fout,) -> (N, Fout) float32."""
    N, Fin = x.shape
    Fout, Fin_w = w.shape
    assert Fin == Fin_w, "weight in_feature mismatch"

    # ---- K (Fin) tiling --------------------------------------------------
    if Fin <= K_RESIDENT_MAX:
        tk, fin_pad = Fin, Fin                 # single K step, no Fin padding
    else:
        tk, fin_pad = K_TILE, _round_up(Fin, K_TILE)
    k_steps = fin_pad // tk
    pad_k = fin_pad - Fin

    # ---- Fout tiling derived from the per-generation VMEM budget ----------
    budget = _vmem_budget_bytes()
    f_min = _round_up(Fout, LANE)
    if tile_f is None:
        fixed = 2 * N * tk * 2 + (1 << 20)          # double-buffered bf16 x + slack
        per_f = 2 * tk * 2 + 3 * N * 4 + 16         # bf16 w (2 bufs) + f32 out (2 bufs) + acc, per feature
        derived = max((budget - fixed) // per_f, LANE)
        tile_f = LANE
        for cand in (2048, 1024, 512, 256, 128):
            if cand <= derived and cand <= f_min:
                tile_f = cand
                break
        # Give v7x's two TensorCores multiple steps on the "parallel" feature
        # axis, but never shrink below 512 lanes (v5e/v6e HBM-roofline sweet spot).
        while tile_f > 512 and (f_min + tile_f - 1) // tile_f < 4:
            tile_f //= 2
    tile_f = max(LANE, _round_up(tile_f, LANE))
    f_padded = _round_up(Fout, tile_f)
    pad_f = f_padded - Fout

    # ---- Operand prep: bf16 matmul operands; pads are exact zeros ---------
    # TODO(synk): in a real model the static weights / BN affine params would
    # be cast + padded once at init rather than per forward call.
    x_bf = x.astype(jnp.bfloat16)
    w_bf = w.astype(jnp.bfloat16)
    if pad_k:
        x_bf = jnp.pad(x_bf, ((0, 0), (0, pad_k)))
    if pad_f or pad_k:
        w_bf = jnp.pad(w_bf, ((0, pad_f), (0, pad_k)))
    g32 = gamma.astype(jnp.float32)
    b32 = beta.astype(jnp.float32)
    if pad_f:
        # Padded features: fc == 0 -> mean 0, var 0, finite scale, output 0 (no NaN).
        g32 = jnp.pad(g32, (0, pad_f), constant_values=1.0)
        b32 = jnp.pad(b32, (0, pad_f))
    gamma2d = g32.reshape(1, f_padded)
    beta2d = b32.reshape(1, f_padded)

    grid = (f_padded // tile_f, k_steps)

    cost = pl.CostEstimate(
        flops=2 * N * fin_pad * f_padded,
        transcendentals=f_padded,
        bytes_accessed=(grid[0] * N * fin_pad * 2      # x re-streamed per Fout tile
                        + f_padded * fin_pad * 2       # w (bf16)
                        + N * f_padded * 4             # out (f32)
                        + 2 * f_padded * 4),           # gamma / beta
    )

    out = pl.pallas_call(
        _fc_bn_relu_kernel,
        out_shape=jax.ShapeDtypeStruct((N, f_padded), jnp.float32),
        grid_spec=pltpu.PrefetchScalarGridSpec(
            num_scalar_prefetch=0,
            grid=grid,
            in_specs=[
                pl.BlockSpec((N, tk), lambda j, k: (0, k)),        # x (bf16)
                pl.BlockSpec((tile_f, tk), lambda j, k: (j, k)),   # w (bf16)
                pl.BlockSpec((1, tile_f), lambda j, k: (0, j)),    # gamma (f32)
                pl.BlockSpec((1, tile_f), lambda j, k: (0, j)),    # beta  (f32)
            ],
            out_specs=pl.BlockSpec((N, tile_f), lambda j, k: (0, j)),
            scratch_shapes=[pltpu.VMEM((N, tile_f), jnp.float32)],
        ),
        compiler_params=pltpu.CompilerParams(
            dimension_semantics=("parallel", "arbitrary"),
            vmem_limit_bytes=budget,                 # explicit on every gen
        ),
        cost_estimate=cost,
    )(x_bf, w_bf, gamma2d, beta2d)

    return out[:, :Fout] if pad_f else out


def reference_forward(x, w, gamma, beta):
    # Same bf16 matmul contraction as the kernel, f32 accumulation, then
    # two-pass BatchNorm1d (training) + ReLU in f32.
    fc = lax.dot_general(
        x.astype(jnp.bfloat16), w.astype(jnp.bfloat16),
        dimension_numbers=(((1,), (1,)), ((), ())),
        preferred_element_type=jnp.float32,
    )
    mean = fc.mean(axis=0, keepdims=True)
    var = ((fc - mean) ** 2).mean(axis=0, keepdims=True)
    bn = (fc - mean) * lax.rsqrt(var + EPS) * gamma[None, :] + beta[None, :]
    return jnp.maximum(bn, 0.0)


if __name__ == "__main__":
    key = jax.random.PRNGKey(0)
    N, in_feature, out_feature = 8, 32, 16

    kx, kw = jax.random.split(key)
    x = jax.random.normal(kx, (N, in_feature), dtype=jnp.float32)
    # Deterministic "init": weights ~ N(0, 1/sqrt(in_feature)); BN affine = identity.
    w = jax.random.normal(kw, (out_feature, in_feature), dtype=jnp.float32) / jnp.sqrt(
        jnp.float32(in_feature)
    )
    gamma = jnp.ones((out_feature,), dtype=jnp.float32)
    beta = jnp.zeros((out_feature,), dtype=jnp.float32)

    out = jax.block_until_ready(fully_connected_forward(x, w, gamma, beta))
    ref = reference_forward(x, w, gamma, beta)

    assert out.shape == (N, out_feature)
    assert jnp.allclose(out, ref, atol=2e-3, rtol=2e-3), "mismatch vs reference"

    print("KERNEL_OK")
</pallas_src>

<mosaic_0001>
module attributes {stable_mosaic.version = 11 : i64} {
  func.func @_fc_bn_relu_kernel(%arg0: i32, %arg1: i32, %arg2: memref<8x32xbf16, #tpu.memory_space<vmem>>, %arg3: memref<128x32xbf16, #tpu.memory_space<vmem>>, %arg4: memref<1x128xf32, #tpu.memory_space<vmem>>, %arg5: memref<1x128xf32, #tpu.memory_space<vmem>>, %arg6: memref<8x128xf32, #tpu.memory_space<vmem>>, %arg7: memref<8x128xf32, #tpu.memory_space<vmem>>) attributes {dimension_semantics = [#tpu.dimension_semantics<parallel>, #tpu.dimension_semantics<arbitrary>], iteration_bounds = array<i64: 1, 1>, scalar_prefetch = 0 : i64, scratch_operands = 1 : i64, tpu.core_type = #tpu.core_type<tc>, window_params = [{transform_indices = @transform_0, window_bounds = array<i64: 8, 32>}, {transform_indices = @transform_1, window_bounds = array<i64: 128, 32>}, {transform_indices = @transform_2, window_bounds = array<i64: 1, 128>}, {transform_indices = @transform_3, window_bounds = array<i64: 1, 128>}, {transform_indices = @transform_4, window_bounds = array<i64: 8, 128>}]} {
    %c0_i32 = arith.constant 0 : i32
    %0 = arith.cmpi eq, %arg1, %c0_i32 : i32
    %1 = arith.extui %0 : i1 to i32
    %c0_i32_0 = arith.constant 0 : i32
    %2 = arith.cmpi ne, %1, %c0_i32_0 : i32
    scf.if %2 {
      %cst_10 = arith.constant 0.000000e+00 : f32
      %12 = vector.broadcast %cst_10 : f32 to vector<8x128xf32>
      %c0_11 = arith.constant 0 : index
      %c0_12 = arith.constant 0 : index
      %13 = vector.load %arg7[%c0_11, %c0_12] : memref<8x128xf32, #tpu.memory_space<vmem>>, vector<8x128xf32>
      tpu.vector_store %arg7[%c0_11, %c0_12], %12 {strides = array<i32>} : memref<8x128xf32, #tpu.memory_space<vmem>>, vector<8x128xf32>,
    } else {
    }
    %c0 = arith.constant 0 : index
    %c0_1 = arith.constant 0 : index
    %3 = vector.load %arg7[%c0, %c0_1] : memref<8x128xf32, #tpu.memory_space<vmem>>, vector<8x128xf32>
    %c0_2 = arith.constant 0 : index
    %c0_3 = arith.constant 0 : index
    %4 = vector.load %arg2[%c0_2, %c0_3] : memref<8x32xbf16, #tpu.memory_space<vmem>>, vector<8x32xbf16>
    %c0_4 = arith.constant 0 : index
    %c0_5 = arith.constant 0 : index
    %5 = vector.load %arg3[%c0_4, %c0_5] : memref<128x32xbf16, #tpu.memory_space<vmem>>, vector<128x32xbf16>
    %cst = arith.constant dense<0.000000e+00> : vector<8x128xf32>
    %6 = tpu.matmul %4, %5, %cst {dimension_numbers = #tpu.dot_dimension_numbers<[1], [1], [0], [0], [0, 0, 1, 0], [], []>} : vector<8x32xbf16>, vector<128x32xbf16>, vector<8x128xf32> -> vector<8x128xf32>
    %7 = arith.addf %3, %6 : vector<8x128xf32>
    %c0_6 = arith.constant 0 : index
    %c0_7 = arith.constant 0 : index
    %8 = vector.load %arg7[%c0_6, %c0_7] : memref<8x128xf32, #tpu.memory_space<vmem>>, vector<8x128xf32>
    tpu.vector_store %arg7[%c0_6, %c0_7], %7 {strides = array<i32>} : memref<8x128xf32, #tpu.memory_space<vmem>>, vector<8x128xf32>,
    %c0_i32_8 = arith.constant 0 : i32
    %9 = arith.cmpi eq, %arg1, %c0_i32_8 : i32
    %10 = arith.extui %9 : i1 to i32
    %c0_i32_9 = arith.constant 0 : i32
    %11 = arith.cmpi ne, %10, %c0_i32_9 : i32
    scf.if %11 {
      %c0_10 = arith.constant 0 : index
      %c0_11 = arith.constant 0 : index
      %12 = vector.load %arg7[%c0_10, %c0_11] : memref<8x128xf32, #tpu.memory_space<vmem>>, vector<8x128xf32>
      %cst_12 = arith.constant dense<0.000000e+00> : vector<128xf32>
      %13 = vector.multi_reduction <add>, %12, %cst_12 [0] : vector<8x128xf32> to vector<128xf32>
      %14 = vector.shape_cast %13 : vector<128xf32> to vector<1x128xf32>
      %cst_13 = arith.constant 1.250000e-01 : f32
      %15 = vector.broadcast %cst_13 : f32 to vector<1x128xf32>
      %16 = arith.mulf %14, %15 : vector<1x128xf32>
      %17 = arith.mulf %12, %12 : vector<8x128xf32>
      %cst_14 = arith.constant dense<0.000000e+00> : vector<128xf32>
      %18 = vector.multi_reduction <add>, %17, %cst_14 [0] : vector<8x128xf32> to vector<128xf32>
      %19 = vector.shape_cast %18 : vector<128xf32> to vector<1x128xf32>
      %cst_15 = arith.constant 1.250000e-01 : f32
      %20 = vector.broadcast %cst_15 : f32 to vector<1x128xf32>
      %21 = arith.mulf %19, %20 : vector<1x128xf32>
      %22 = arith.mulf %16, %16 : vector<1x128xf32>
      %23 = arith.subf %21, %22 : vector<1x128xf32>
      %cst_16 = arith.constant 0.000000e+00 : f32
      %24 = vector.broadcast %cst_16 : f32 to vector<1x128xf32>
      %25 = arith.maximumf %23, %24 : vector<1x128xf32>
      %cst_17 = arith.constant 9.99999974E-6 : f32
      %26 = vector.broadcast %cst_17 : f32 to vector<1x128xf32>
      %27 = arith.addf %25, %26 : vector<1x128xf32>
      %28 = math.rsqrt %27 : vector<1x128xf32>
      %c0_18 = arith.constant 0 : index
      %c0_19 = arith.constant 0 : index
      %29 = vector.load %arg4[%c0_18, %c0_19] : memref<1x128xf32, #tpu.memory_space<vmem>>, vector<1x128xf32>
      %30 = arith.mulf %28, %29 : vector<1x128xf32>
      %c0_20 = arith.constant 0 : index
      %c0_21 = arith.constant 0 : index
      %31 = vector.load %arg5[%c0_20, %c0_21] : memref<1x128xf32, #tpu.memory_space<vmem>>, vector<1x128xf32>
      %32 = arith.mulf %16, %30 : vector<1x128xf32>
      %33 = arith.subf %31, %32 : vector<1x128xf32>
      %34 = vector.broadcast %30 : vector<1x128xf32> to vector<8x128xf32>
      %35 = arith.mulf %12, %34 : vector<8x128xf32>
      %36 = vector.broadcast %33 : vector<1x128xf32> to vector<8x128xf32>
      %37 = arith.addf %35, %36 : vector<8x128xf32>
      %cst_22 = arith.constant 0.000000e+00 : f32
      %38 = vector.broadcast %cst_22 : f32 to vector<8x128xf32>
      %39 = arith.maximumf %37, %38 : vector<8x128xf32>
      %c0_23 = arith.constant 0 : index
      %c0_24 = arith.constant 0 : index
      %40 = vector.load %arg6[%c0_23, %c0_24] : memref<8x128xf32, #tpu.memory_space<vmem>>, vector<8x128xf32>
      tpu.vector_store %arg6[%c0_23, %c0_24], %39 {strides = array<i32>} : memref<8x128xf32, #tpu.memory_space<vmem>>, vector<8x128xf32>,
    } else {
    }
    return
  }
  func.func @transform_0(%arg0: i32, %arg1: i32) -> (i32, i32) {
    %c0_i32 = arith.constant 0 : i32
    %c0_i32_0 = arith.constant 0 : i32
    return %c0_i32, %arg1 : i32, i32
  }
  func.func @transform_1(%arg0: i32, %arg1: i32) -> (i32, i32) {
    %c0_i32 = arith.constant 0 : i32
    return %arg0, %arg1 : i32, i32
  }
  func.func @transform_2(%arg0: i32, %arg1: i32) -> (i32, i32) {
    %c0_i32 = arith.constant 0 : i32
    %c0_i32_0 = arith.constant 0 : i32
    return %c0_i32, %arg0 : i32, i32
  }
  func.func @transform_3(%arg0: i32, %arg1: i32) -> (i32, i32) {
    %c0_i32 = arith.constant 0 : i32
    %c0_i32_0 = arith.constant 0 : i32
    return %c0_i32, %arg0 : i32, i32
  }
  func.func @transform_4(%arg0: i32, %arg1: i32) -> (i32, i32) {
    %c0_i32 = arith.constant 0 : i32
    %c0_i32_0 = arith.constant 0 : i32
    return %c0_i32, %arg0 : i32, i32
  }
}

</mosaic_0001>

<llo_original>
// kernel: tpu_custom_call.1
$region0: #{tpu_custom_call.1}
  #allocation0 [shape = 'u32[]', space=smem, size = 0x4, offset = 0x4, fixed_abs, tag = 'smem constant byte address 0x4 - core index']
  #allocation1 [shape = 'u32[144,128]{1,0:T(1,128)}', space=vmem, size = 0x12000, scoped, tag = 'internal scratch']
  #allocation2 [shape = 'f32[8,128]{1,0:T(8,128)}', space=vmem, size = 0x1000, scoped, tag = 'scratch operand']
  %s0 = inlined_call_operand.vmem [shape: bf16[8,32], index: 0, kind: input, shape index: {}]
  %s1 = inlined_call_operand.vmem [shape: bf16[128,32], index: 1, kind: input, shape index: {}]
  %s2 = inlined_call_operand.vmem [shape: f32[1,128], index: 2, kind: input, shape index: {}]
  %s3 = inlined_call_operand.vmem [shape: f32[1,128], index: 3, kind: input, shape index: {}]
  %s4 = inlined_call_operand.hbm [shape: f32[8,128], index: 4, kind: output, shape index: {}]
  %s5 = sld [smem:[#allocation0]]
  $region34: #{tpu_custom_call.1} parent=0
    _
  %s7 = ssub.s32 1, %s5
  %s8 = scalar_select 0, %s7, %s5
  $region1: #{tpu_custom_call.1} parent=0
    #allocation3 [shape = 'u8[4096]{0}', space=vmem, size = 0x1000, scoped, tag = 'output window, operand 0, single buffered']
    #allocation4 [shape = 's32[1]{0}', space=sflag, size = 0x4, scoped, tag = 'scoped memory for tpu_custom_call.1']
    %9 = vsyncpa [#allocation4], 0
    // Predicated region
    $region2: #{tpu_custom_call.1} parent=1 // pred_check
      _
    $region3: #{tpu_custom_call.1} parent=1 // pred_check_branch
      %11 = sbr.rel (0) target = $region5
    $region4: #{tpu_custom_call.1} parent=1 // pred_region
      _
    $region5: #{tpu_custom_call.1} parent=1 // pred_fallthru
      _
    // Predicated region
    $region6: #{tpu_custom_call.1} parent=1 // pred_check
      _
    $region7: #{tpu_custom_call.1} parent=1 // pred_check_branch
      %13 = sbr.rel (0) target = $region9
    $region8: #{tpu_custom_call.1} parent=1 // pred_region
      _
    $region9: #{tpu_custom_call.1} parent=1 // pred_fallthru
      _
    // Predicated region
    $region10: #{tpu_custom_call.1} parent=1 // pred_check
      _
    $region11: #{tpu_custom_call.1} parent=1 // pred_check_branch
      %15 = sbr.rel (0) target = $region13
    $region12: #{tpu_custom_call.1} parent=1 // pred_region
      _
    $region13: #{tpu_custom_call.1} parent=1 // pred_fallthru
      _
    // Predicated region
    $region14: #{tpu_custom_call.1} parent=1 // pred_check
      _
    $region15: #{tpu_custom_call.1} parent=1 // pred_check_branch
      %17 = sbr.rel (0) target = $region17
    $region16: #{tpu_custom_call.1} parent=1 // pred_region
      _
    $region17: #{tpu_custom_call.1} parent=1 // pred_fallthru
      _
    %p19 = scmp.eq.s32.totalorder 0, 0
    // Predicated region
    $region18: #{tpu_custom_call.1} parent=1 // pred_check
      %p20 = pneg %p19
    $region19: #{tpu_custom_call.1} parent=1 // pred_check_branch
      %22 = sbr.rel (%p20) target = $region21
    $region20: #{tpu_custom_call.1} parent=1 // pred_region
      %23 = vst [vmem:[#allocation2] sm:$0xff] 0.0
    $region21: #{tpu_custom_call.1} parent=1 // pred_fallthru
      _
    %v24 = vld [vmem:[#allocation2] sm:$0xff]
    %v25 = vld [vmem:[%s0] sm:$0xf]
    %v26 = vld [vmem:[%s1] sm:$0xf]
    %v27 = vld [vmem:[%s1 + $0x4] sm:$0xf]
    %v28 = vld [vmem:[%s1 + $0x8] sm:$0xf]
    %v29 = vld [vmem:[%s1 + $0xc] sm:$0xf]
    %v30 = vld [vmem:[%s1 + $0x10] sm:$0xf]
    %v31 = vld [vmem:[%s1 + $0x14] sm:$0xf]
    %v32 = vld [vmem:[%s1 + $0x18] sm:$0xf]
    %v33 = vld [vmem:[%s1 + $0x1c] sm:$0xf]
    %v34 = vld [vmem:[%s1 + $0x20] sm:$0xf]
    %v35 = vld [vmem:[%s1 + $0x24] sm:$0xf]
    %v36 = vld [vmem:[%s1 + $0x28] sm:$0xf]
    %v37 = vld [vmem:[%s1 + $0x2c] sm:$0xf]
    %v38 = vld [vmem:[%s1 + $0x30] sm:$0xf]
    %v39 = vld [vmem:[%s1 + $0x34] sm:$0xf]
    %v40 = vld [vmem:[%s1 + $0x38] sm:$0xf]
    %v41 = vld [vmem:[%s1 + $0x3c] sm:$0xf]
    %v58 = vunpack.c.l.b16 %v26
    %v59 = vunpack.c.l.b16 %v27
    %v60 = vunpack.c.l.b16 %v28
    %v61 = vunpack.c.l.b16 %v29
    %v62 = vunpack.c.l.b16 %v30
    %v63 = vunpack.c.l.b16 %v31
    %v64 = vunpack.c.l.b16 %v32
    %v65 = vunpack.c.l.b16 %v33
    %v66 = vunpack.c.l.b16 %v34
    %v67 = vunpack.c.l.b16 %v35
    %v68 = vunpack.c.l.b16 %v36
    %v69 = vunpack.c.l.b16 %v37
    %v70 = vunpack.c.l.b16 %v38
    %v71 = vunpack.c.l.b16 %v39
    %v72 = vunpack.c.l.b16 %v40
    %v73 = vunpack.c.l.b16 %v41
    %v74 = vpack.c.b16 %v59, %v58
    %v75 = vpack.c.b16 %v61, %v60
    %v76 = vpack.c.b16 %v63, %v62
    %v77 = vpack.c.b16 %v65, %v64
    %v78 = vpack.c.b16 %v67, %v66
    %v79 = vpack.c.b16 %v69, %v68
    %v80 = vpack.c.b16 %v71, %v70
    %v81 = vpack.c.b16 %v73, %v72
    %vm82 = vcmask 261120
    %v84 = vsel %vm82, %v25, 0
    %v87 = vsel %vm82, %v74, 0
    %v90 = vsel %vm82, %v75, 0
    %v93 = vsel %vm82, %v76, 0
    %v96 = vsel %vm82, %v77, 0
    %v99 = vsel %vm82, %v78, 0
    %v102 = vsel %vm82, %v79, 0
    %v105 = vsel %vm82, %v80, 0
    %v108 = vsel %vm82, %v81, 0
    %110 = vmatprep.subr.bf16.mxu0 0
    %111 = vmatpush1.bf16.xpose.msra.mxu0 %v108
    %112 = vmatprep.subr.bf16.mxu0 0
    %113 = vmatpush1.bf16.xpose.msra.mxu0 %v105
    %114 = vmatprep.subr.bf16.mxu0 0
    %115 = vmatpush1.bf16.xpose.msra.mxu0 %v102
    %116 = vmatprep.subr.bf16.mxu0 0
    %117 = vmatpush1.bf16.xpose.msra.mxu0 %v99
    %118 = vmatprep.subr.bf16.mxu0 0
    %119 = vmatpush1.bf16.xpose.msra.mxu0 %v96
    %120 = vmatprep.subr.bf16.mxu0 0
    %121 = vmatpush1.bf16.xpose.msra.mxu0 %v93
    %122 = vmatprep.subr.bf16.mxu0 0
    %123 = vmatpush1.bf16.xpose.msra.mxu0 %v90
    %124 = vmatprep.subr.bf16.mxu0 0
    %125 = vmatpush1.bf16.xpose.msra.mxu0 %v87
    %126 = vmatprep.subr.bf16.mxu0 0
    %127 = vmatpush2.bf16.xpose.msra.mxu0 0
    %128 = vmatprep.subr.bf16.mxu0 0
    %129 = vmatpush2.bf16.xpose.msra.mxu0 0
    %130 = vmatprep.subr.bf16.mxu0 0
    %131 = vmatpush2.bf16.xpose.msra.mxu0 0
    %132 = vmatprep.subr.bf16.mxu0 0
    %133 = vmatpush2.bf16.xpose.msra.mxu0 0
    %134 = vmatprep.subr.bf16.mxu0 0
    %135 = vmatpush2.bf16.xpose.msra.mxu0 0
    %136 = vmatprep.subr.bf16.mxu0 0
    %137 = vmatpush2.bf16.xpose.msra.mxu0 0
    %138 = vmatprep.subr.bf16.mxu0 0
    %139 = vmatpush2.bf16.xpose.msra.mxu0 0
    %140 = vmatprep.subr.bf16.mxu0 0
    %141 = vmatpush2.bf16.xpose.msra.mxu0 0
    %142 = vmatprep.mubr.bf16.mxu0 0
    %143 = vmatmul.mubr.bf16.gmra.mxu0 %v84
    %v144 = vpop.f32.mrf.mxu0
    %v145 = vadd.f32 0.0, %v144
    %v146 = vpop.f32.mrf.mxu0
    %v147 = vpop.f32.mrf.mxu0
    %v148 = vpop.f32.mrf.mxu0
    %149 = vdwg.mxu0
    %v150 = vadd.f32 %v24, %v145
    %151 = vst [vmem:[#allocation2] sm:$0xff] %v150
    // Predicated region
    $region22: #{tpu_custom_call.1} parent=1 // pred_check
      %p152 = pneg %p19
    $region23: #{tpu_custom_call.1} parent=1 // pred_check_branch
      %154 = sbr.rel (%p152) target = $region25
    $region24: #{tpu_custom_call.1} parent=1 // pred_region
      %v155 = vld [vmem:[#allocation2] sm:$0xff]
      %v156 = vrot.slane %v155, 4
      %v157 = vadd.f32 %v155, %v156
      %v158 = vrot.slane %v157, 2
      %v159 = vadd.f32 %v157, %v158
      %v160 = vrot.slane %v159, 1
      %v161 = vadd.f32 %v159, %v160
      %v162 = vmul.f32 %v161, 0.125
      %v163 = vmul.f32 %v155, %v155
      %v164 = vrot.slane %v163, 4
      %v165 = vadd.f32 %v163, %v164
      %v166 = vrot.slane %v165, 2
      %v167 = vadd.f32 %v165, %v166
      %v168 = vrot.slane %v167, 1
      %v169 = vadd.f32 %v167, %v168
      %v170 = vmul.f32 %v169, 0.125
      %v171 = vmul.f32 %v162, %v162
      %v172 = vsub.f32 %v170, %v171
      %v173 = vmax.f32 %v172, 0.0
      %v174 = vadd.f32 %v173, 1e-05
      %v175 = vrsqrt.pop %v174
      %v176 = vld [vmem:[%s2] sm:$0x1]
      %v177 = vmul.f32 %v175, %v176
      %v178 = vld [vmem:[%s3] sm:$0x1]
      %v179 = vmul.f32 %v162, %v177
      %v180 = vsub.f32 %v178, %v179
      %v181 = vlaneseq
      %v182 = vshrl.u32 %v181, 7
      %v183 = vsub.s32 0, %v182
      %v184 = vrot.slane %v177, %v183
      %v185 = vmul.f32 %v155, %v184
      %v187 = vlaneseq
      %v188 = vshrl.u32 %v187, 7
      %v189 = vsub.s32 0, %v188
      %v190 = vrot.slane %v180, %v189
      %v192 = vadd.f32 %v185, %v190
      %v193 = vmax.f32 %v192, 0.0
      %194 = vst [vmem:[#allocation3] sm:$0xff] %v193
    $region25: #{tpu_custom_call.1} parent=1 // pred_fallthru
      _
    // Predicated region
    $region26: #{tpu_custom_call.1} parent=1 // pred_check
      _
    $region27: #{tpu_custom_call.1} parent=1 // pred_check_branch
      %196 = sbr.rel (0) target = $region29
    $region28: #{tpu_custom_call.1} parent=1 // pred_region
      %s198 = ssub.s32 128, 128
      %199 = vsyncadd [#allocation4], %s198
      %s201 = sshll.u32 [#allocation3], 4
      %s202 = int_to_ptr.vmem [resolvable:$true] %s201
      %204 = dma.vmem_to_hbm [thread:$0]  %s202, 128, %s4, [#allocation4]
    $region29: #{tpu_custom_call.1} parent=1 // pred_fallthru
      _
    // Predicated region
    $region30: #{tpu_custom_call.1} parent=1 // pred_check
      _
    $region31: #{tpu_custom_call.1} parent=1 // pred_check_branch
      %206 = sbr.rel (0) target = $region33
    $region32: #{tpu_custom_call.1} parent=1 // pred_region
      %207 = dma.done [#allocation4], 128
    $region33: #{tpu_custom_call.1} parent=1 // pred_fallthru
      _
    %208 = vsyncpa [#allocation4], 1

</llo_original>
